<compile_context>
chip_gen: v7x
topology: tpu7x:2x2x1
jax: 0.10.0
libtpu: 0.0.40
codegen_flags: <defaults>
</compile_context>

<pallas_src>
import functools

import jax
import jax.numpy as jnp
from jax.experimental import pallas as pl
from jax.experimental.pallas import tpu as pltpu

EPS = 1e-5  # nn.InstanceNorm1d default


# ---------------------------------------------------------------------------
# Kernel
# ---------------------------------------------------------------------------
def _lane_group_sum(v, g, e):
    # v: (Bblk, g*e) where lane index = j*e + c ; returns per-channel sum (Bblk, e).
    out = v[:, 0:e]
    for j in range(1, g):
        out = out + v[:, j * e:(j + 1) * e]
    return out


def _add_inorm_kernel(x1_ref, x2_ref, gamma_ref, beta_ref, o_ref, *,
                      g, e, inv_n, chunk, n_full, rem):
    # x1_ref/x2_ref/o_ref: (Bblk, Nsub, L) with L = g*e (lane index = j*e + channel)
    # gamma_ref/beta_ref : (1, e) f32 affine params, resident across the grid
    bblk, nsub, L = o_ref.shape

    def read_f32(off, size):
        # The module's "add", recomputed per chunk, f32 accumulation.
        return (x1_ref[:, pl.ds(off, size), :] +
                x2_ref[:, pl.ds(off, size), :]).astype(jnp.float32)

    # ---- Pass 1: streaming per-(row, lane) sum / sum-of-squares -------------
    s1 = jnp.zeros((bblk, L), jnp.float32)
    s2 = jnp.zeros((bblk, L), jnp.float32)
    if n_full > 0:
        def stats_body(i, carry):
            a1, a2 = carry
            off = pl.multiple_of(i * chunk, chunk)
            x = read_f32(off, chunk)
            return a1 + jnp.sum(x, axis=1), a2 + jnp.sum(x * x, axis=1)

        s1, s2 = jax.lax.fori_loop(0, n_full, stats_body, (s1, s2))
    if rem > 0:                      # static (possibly unaligned) tail chunk
        x = read_f32(n_full * chunk, rem)
        s1 = s1 + jnp.sum(x, axis=1)
        s2 = s2 + jnp.sum(x * x, axis=1)

    if g > 1:
        # Collapse the g packed sequence-position groups -> per-channel totals.
        s1 = _lane_group_sum(s1, g, e)                         # (Bblk, e)
        s2 = _lane_group_sum(s2, g, e)                         # (Bblk, e)

    mean = s1 * inv_n                                          # per (batch, channel)
    # One-pass biased variance (InstanceNorm semantics).  Fine in f32 for
    # normalized activations; a mean-shifted two-pass form would be needed only
    # for |mean| >> std inputs.
    var = s2 * inv_n - mean * mean
    inv = jax.lax.rsqrt(var + EPS)

    # Fuse normalization + affine into a single per-element FMA.
    scale = inv * gamma_ref[...]                               # (Bblk, e)
    shift = beta_ref[...] - mean * scale                       # (Bblk, e)
    if g > 1:
        scale = jnp.concatenate([scale] * g, axis=-1)          # (Bblk, L)
        shift = jnp.concatenate([shift] * g, axis=-1)          # (Bblk, L)
    scale = scale[:, None, :]
    shift = shift[:, None, :]

    # ---- Pass 2: re-read inputs, recompute add, normalize, store ------------
    def write(off, size):
        x = read_f32(off, size)
        o_ref[:, pl.ds(off, size), :] = (x * scale + shift).astype(o_ref.dtype)

    if n_full > 0:
        def write_body(i, carry):
            off = pl.multiple_of(i * chunk, chunk)
            write(off, chunk)
            return carry

        jax.lax.fori_loop(0, n_full, write_body, 0)
    if rem > 0:
        write(n_full * chunk, rem)


# ---------------------------------------------------------------------------
# Host-side sizing helpers
# ---------------------------------------------------------------------------
def _vmem_capacity_bytes():
    """Generation-aware VMEM size (v5e/v6e: 128 MiB; v7x: 64 MiB per core)."""
    try:
        cap = getattr(pltpu.get_tpu_info(), "vmem_capacity_bytes", None)
        if cap:
            return int(cap)
    except Exception:
        pass
    return 64 << 20  # conservative fallback (v7x per-TensorCore VMEM)


def _choose_bblk(B, row_bytes, target_bytes, max_bblk, min_block_bytes=512 << 10):
    """Batch rows per grid block.

    Prefers divisors of B (no partial tail block), <= target_bytes per array per
    block, and an even grid of >= 4 steps (v7x: 2 TensorCores x >= 2 pipelined
    steps each) while blocks stay >= ~512 KiB (HBM-roofline knee).
    """
    fitting = [d for d in range(1, B + 1)
               if B % d == 0 and d <= max_bblk and d * row_bytes <= target_bytes]
    if not fitting:
        # TODO(synk): a single (N, E) row larger than the block budget would need
        # a second "arbitrary" grid axis over N with running s1/s2 scratch; CVRP
        # shapes (N ~ hundreds, E = 128) never get close.
        return 1
    fitting.sort(reverse=True)
    for d in fitting:                       # even grid with >= 4 steps
        steps = B // d
        if steps >= 4 and steps % 2 == 0 and d * row_bytes >= min_block_bytes:
            return d
    for d in fitting:                       # else >= 2 steps (some pipelining)
        if B // d >= 2 and d * row_bytes >= min_block_bytes:
            return d
    best = fitting[0]
    # Non-divisor fallback (prime/odd B with small rows): cdiv grid + masked
    # tail block beats bblk=1 micro-blocks below the efficiency knee.
    cand = max(1, min(B, max_bblk, target_bytes // row_bytes))
    if cand * row_bytes >= min_block_bytes and cand > 2 * best:
        return cand
    return best


def _choose_chunk(nsub, bytes_per_seq_row, target_bytes=256 << 10):
    """Sequence rows per in-kernel chunk: multiple of 8 (aligned dynamic sublane
    slices), sized so one f32 chunk is ~target_bytes."""
    c = max(8, (target_bytes // max(1, bytes_per_seq_row)) // 8 * 8)
    return min(c, max(8, (nsub // 8) * 8))


# ---------------------------------------------------------------------------
# Public wrapper
# ---------------------------------------------------------------------------
def add_and_instance_norm(input1, input2, weight, bias):
    """input1, input2: (B, N, E); weight, bias: (E,) -> returns (B, N, E)."""
    B, N, E = input1.shape
    dtype = input1.dtype
    itemsize = jnp.dtype(dtype).itemsize

    # ---- Lane-dense layout: make the last (lane) dim a multiple of 128 ------
    g = 1
    if E < 128 and 128 % E == 0 and N % (128 // E) == 0:
        g = 128 // E

    if g > 1:
        # Fold g consecutive sequence positions into lanes (free contiguous reshape).
        Nsub, L, e_k = N // g, g * E, E
        x1 = input1.reshape(B, Nsub, L)
        x2 = input2.reshape(B, Nsub, L)
        w, b = weight, bias
    else:
        # If E is not a multiple of 128, pad channels (one host copy) so output
        # stores stay full-width `vst` rather than masked `vst.msk`.
        e_pad = (-E) % 128
        Nsub, L, e_k = N, E + e_pad, E + e_pad
        if e_pad:
            pad3 = ((0, 0), (0, 0), (0, e_pad))
            x1 = jnp.pad(input1, pad3)
            x2 = jnp.pad(input2, pad3)
            w = jnp.pad(weight, (0, e_pad))
            b = jnp.pad(bias, (0, e_pad))
        else:
            x1, x2, w, b = input1, input2, weight, bias

    gamma = w.reshape(1, e_k).astype(jnp.float32)
    beta = b.reshape(1, e_k).astype(jnp.float32)

    # ---- Generation-aware block sizing / grid --------------------------------
    vmem_cap = _vmem_capacity_bytes()
    target_bytes = int(min(4 << 20, max(1 << 20, vmem_cap // 16)))
    row_bytes = Nsub * L * itemsize
    max_bblk = max(1, (1 << 20) // (L * 32))        # keep one 8-row f32 chunk ~<= 1 MiB
    bblk = _choose_bblk(B, row_bytes, target_bytes, max_bblk)
    grid = pl.cdiv(B, bblk)
    block_bytes = bblk * row_bytes

    chunk = _choose_chunk(Nsub, bblk * L * 4)
    n_full, rem = Nsub // chunk, Nsub % chunk

    # Scoped-VMEM budget: 2 (double-buffer) x 3 arrays x block + temps/headroom,
    # capped at 3/4 of this generation's VMEM (covers v5e's 16 MiB default).
    vmem_limit = int(min((vmem_cap * 3) // 4,
                         max(32 << 20, 6 * block_bytes + (16 << 20))))

    kernel = functools.partial(
        _add_inorm_kernel, g=g, e=(E if g > 1 else e_k), inv_n=1.0 / N,
        chunk=chunk, n_full=n_full, rem=rem)

    out = pl.pallas_call(
        kernel,
        out_shape=jax.ShapeDtypeStruct((B, Nsub, L), dtype),
        grid_spec=pltpu.PrefetchScalarGridSpec(
            num_scalar_prefetch=0,
            grid=(grid,),
            in_specs=[
                pl.BlockSpec((bblk, Nsub, L), lambda i: (i, 0, 0)),
                pl.BlockSpec((bblk, Nsub, L), lambda i: (i, 0, 0)),
                pl.BlockSpec((1, e_k), lambda i: (0, 0)),
                pl.BlockSpec((1, e_k), lambda i: (0, 0)),
            ],
            out_specs=pl.BlockSpec((bblk, Nsub, L), lambda i: (i, 0, 0)),
        ),
        compiler_params=pltpu.CompilerParams(
            dimension_semantics=("parallel",),
            vmem_limit_bytes=vmem_limit,
        ),
    )(x1, x2, gamma, beta)

    if g > 1:
        return out.reshape(B, N, E)
    if L != E:
        return out[:, :, :E]
    return out


# ---------------------------------------------------------------------------
# Reference + self-test
# ---------------------------------------------------------------------------
def _reference(input1, input2, weight, bias):
    # Pure-JAX reference mirroring the PyTorch module.
    added = input1 + input2                                     # (B, N, E)
    x = jnp.transpose(added, (0, 2, 1)).astype(jnp.float32)     # (B, E, N)
    mean = jnp.mean(x, axis=2, keepdims=True)
    var = jnp.mean((x - mean) ** 2, axis=2, keepdims=True)
    y = (x - mean) / jnp.sqrt(var + EPS)
    y = y * weight[None, :, None] + bias[None, :, None]
    return jnp.transpose(y, (0, 2, 1)).astype(input1.dtype)     # (B, N, E)


def _run_case(key, B, N, E):
    k1, k2 = jax.random.split(key)
    a1 = jax.random.normal(k1, (B, N, E), dtype=jnp.float32)
    a2 = jax.random.normal(k2, (B, N, E), dtype=jnp.float32)
    w = jnp.ones((E,), dtype=jnp.float32) + 0.01 * jnp.arange(E, dtype=jnp.float32)
    b = 0.1 * jnp.arange(E, dtype=jnp.float32)
    out = jax.block_until_ready(add_and_instance_norm(a1, a2, w, b))
    ref = _reference(a1, a2, w, b)
    assert out.shape == (B, N, E)
    assert jnp.allclose(out, ref, atol=1e-4, rtol=1e-4), (
        f"({B},{N},{E}) max abs diff = {jnp.max(jnp.abs(out - ref))}"
    )


if __name__ == "__main__":
    key = jax.random.PRNGKey(0)
    k0, k1, k2 = jax.random.split(key, 3)
    # Small shapes consistent with the module: batch=2, problem(seq)=8, embedding_dim=32
    _run_case(k0, B=2, N=8, E=32)    # lane-packed path (E divides 128)
    _run_case(k1, B=2, N=8, E=128)   # already lane-dense path
    _run_case(k2, B=2, N=8, E=24)    # channel-padded path (E not a 128 divisor)
    print("KERNEL_OK")
</pallas_src>

<mosaic_0001>
module attributes {stable_mosaic.version = 11 : i64} {
  func.func @_add_inorm_kernel(%arg0: i32, %arg1: memref<2x2x128xf32, #tpu.memory_space<vmem>>, %arg2: memref<2x2x128xf32, #tpu.memory_space<vmem>>, %arg3: memref<1x32xf32, #tpu.memory_space<vmem>>, %arg4: memref<1x32xf32, #tpu.memory_space<vmem>>, %arg5: memref<2x2x128xf32, #tpu.memory_space<vmem>>) attributes {dimension_semantics = [#tpu.dimension_semantics<parallel>], iteration_bounds = array<i64: 1>, scalar_prefetch = 0 : i64, scratch_operands = 0 : i64, tpu.core_type = #tpu.core_type<tc>, window_params = [{transform_indices = @transform_0, window_bounds = array<i64: 2, 2, 128>}, {transform_indices = @transform_1, window_bounds = array<i64: 2, 2, 128>}, {pipeline_mode = #tpu.pipeline_mode<synchronous>, transform_indices = @transform_2, window_bounds = array<i64: 1, 32>}, {pipeline_mode = #tpu.pipeline_mode<synchronous>, transform_indices = @transform_3, window_bounds = array<i64: 1, 32>}, {transform_indices = @transform_4, window_bounds = array<i64: 2, 2, 128>}]} {
    %cst = arith.constant 0.000000e+00 : f32
    %0 = vector.broadcast %cst : f32 to vector<2x128xf32>
    %cst_0 = arith.constant 0.000000e+00 : f32
    %1 = vector.broadcast %cst_0 : f32 to vector<2x128xf32>
    %c0 = arith.constant 0 : index
    %c0_1 = arith.constant 0 : index
    %c0_2 = arith.constant 0 : index
    %2 = vector.load %arg1[%c0, %c0_1, %c0_2] : memref<2x2x128xf32, #tpu.memory_space<vmem>>, vector<2x2x128xf32>
    %c0_3 = arith.constant 0 : index
    %c0_4 = arith.constant 0 : index
    %c0_5 = arith.constant 0 : index
    %3 = vector.load %arg2[%c0_3, %c0_4, %c0_5] : memref<2x2x128xf32, #tpu.memory_space<vmem>>, vector<2x2x128xf32>
    %4 = arith.addf %2, %3 : vector<2x2x128xf32>
    %cst_6 = arith.constant dense<0.000000e+00> : vector<2x128xf32>
    %5 = vector.multi_reduction <add>, %4, %cst_6 [1] : vector<2x2x128xf32> to vector<2x128xf32>
    %6 = arith.addf %0, %5 : vector<2x128xf32>
    %7 = arith.mulf %4, %4 : vector<2x2x128xf32>
    %cst_7 = arith.constant dense<0.000000e+00> : vector<2x128xf32>
    %8 = vector.multi_reduction <add>, %7, %cst_7 [1] : vector<2x2x128xf32> to vector<2x128xf32>
    %9 = arith.addf %1, %8 : vector<2x128xf32>
    %10 = vector.extract_strided_slice %6 {offsets = [0, 0], sizes = [2, 32], strides = [1, 1]} : vector<2x128xf32> to vector<2x32xf32>
    %11 = vector.extract_strided_slice %6 {offsets = [0, 32], sizes = [2, 32], strides = [1, 1]} : vector<2x128xf32> to vector<2x32xf32>
    %12 = arith.addf %10, %11 : vector<2x32xf32>
    %13 = vector.extract_strided_slice %6 {offsets = [0, 64], sizes = [2, 32], strides = [1, 1]} : vector<2x128xf32> to vector<2x32xf32>
    %14 = arith.addf %12, %13 : vector<2x32xf32>
    %15 = vector.extract_strided_slice %6 {offsets = [0, 96], sizes = [2, 32], strides = [1, 1]} : vector<2x128xf32> to vector<2x32xf32>
    %16 = arith.addf %14, %15 : vector<2x32xf32>
    %17 = vector.extract_strided_slice %9 {offsets = [0, 0], sizes = [2, 32], strides = [1, 1]} : vector<2x128xf32> to vector<2x32xf32>
    %18 = vector.extract_strided_slice %9 {offsets = [0, 32], sizes = [2, 32], strides = [1, 1]} : vector<2x128xf32> to vector<2x32xf32>
    %19 = arith.addf %17, %18 : vector<2x32xf32>
    %20 = vector.extract_strided_slice %9 {offsets = [0, 64], sizes = [2, 32], strides = [1, 1]} : vector<2x128xf32> to vector<2x32xf32>
    %21 = arith.addf %19, %20 : vector<2x32xf32>
    %22 = vector.extract_strided_slice %9 {offsets = [0, 96], sizes = [2, 32], strides = [1, 1]} : vector<2x128xf32> to vector<2x32xf32>
    %23 = arith.addf %21, %22 : vector<2x32xf32>
    %cst_8 = arith.constant 1.250000e-01 : f32
    %24 = vector.broadcast %cst_8 : f32 to vector<2x32xf32>
    %25 = arith.mulf %16, %24 : vector<2x32xf32>
    %cst_9 = arith.constant 1.250000e-01 : f32
    %26 = vector.broadcast %cst_9 : f32 to vector<2x32xf32>
    %27 = arith.mulf %23, %26 : vector<2x32xf32>
    %28 = arith.mulf %25, %25 : vector<2x32xf32>
    %29 = arith.subf %27, %28 : vector<2x32xf32>
    %cst_10 = arith.constant 9.99999974E-6 : f32
    %30 = vector.broadcast %cst_10 : f32 to vector<2x32xf32>
    %31 = arith.addf %29, %30 : vector<2x32xf32>
    %32 = math.rsqrt %31 : vector<2x32xf32>
    %c0_11 = arith.constant 0 : index
    %c0_12 = arith.constant 0 : index
    %33 = vector.load %arg3[%c0_11, %c0_12] : memref<1x32xf32, #tpu.memory_space<vmem>>, vector<1x32xf32>
    %34 = vector.broadcast %33 : vector<1x32xf32> to vector<2x32xf32>
    %35 = arith.mulf %32, %34 : vector<2x32xf32>
    %c0_13 = arith.constant 0 : index
    %c0_14 = arith.constant 0 : index
    %36 = vector.load %arg4[%c0_13, %c0_14] : memref<1x32xf32, #tpu.memory_space<vmem>>, vector<1x32xf32>
    %37 = arith.mulf %25, %35 : vector<2x32xf32>
    %38 = vector.broadcast %36 : vector<1x32xf32> to vector<2x32xf32>
    %39 = arith.subf %38, %37 : vector<2x32xf32>
    %40 = tpu.concatenate %35, %35, %35, %35 in 1 : vector<2x32xf32>, vector<2x32xf32>, vector<2x32xf32>, vector<2x32xf32> -> vector<2x128xf32>
    %41 = tpu.concatenate %39, %39, %39, %39 in 1 : vector<2x32xf32>, vector<2x32xf32>, vector<2x32xf32>, vector<2x32xf32> -> vector<2x128xf32>
    %42 = vector.shape_cast %40 : vector<2x128xf32> to vector<2x1x128xf32>
    %43 = vector.shape_cast %41 : vector<2x128xf32> to vector<2x1x128xf32>
    %c0_15 = arith.constant 0 : index
    %c0_16 = arith.constant 0 : index
    %c0_17 = arith.constant 0 : index
    %44 = vector.load %arg1[%c0_15, %c0_16, %c0_17] : memref<2x2x128xf32, #tpu.memory_space<vmem>>, vector<2x2x128xf32>
    %c0_18 = arith.constant 0 : index
    %c0_19 = arith.constant 0 : index
    %c0_20 = arith.constant 0 : index
    %45 = vector.load %arg2[%c0_18, %c0_19, %c0_20] : memref<2x2x128xf32, #tpu.memory_space<vmem>>, vector<2x2x128xf32>
    %46 = arith.addf %44, %45 : vector<2x2x128xf32>
    %47 = vector.broadcast %42 : vector<2x1x128xf32> to vector<2x2x128xf32>
    %48 = arith.mulf %46, %47 : vector<2x2x128xf32>
    %49 = vector.broadcast %43 : vector<2x1x128xf32> to vector<2x2x128xf32>
    %50 = arith.addf %48, %49 : vector<2x2x128xf32>
    %c0_21 = arith.constant 0 : index
    %c0_22 = arith.constant 0 : index
    %c0_23 = arith.constant 0 : index
    %51 = vector.load %arg5[%c0_21, %c0_22, %c0_23] : memref<2x2x128xf32, #tpu.memory_space<vmem>>, vector<2x2x128xf32>
    tpu.vector_store %arg5[%c0_21, %c0_22, %c0_23], %50 {strides = array<i32>} : memref<2x2x128xf32, #tpu.memory_space<vmem>>, vector<2x2x128xf32>,
    return
  }
  func.func @transform_0(%arg0: i32) -> (i32, i32, i32) {
    %c0_i32 = arith.constant 0 : i32
    %c0_i32_0 = arith.constant 0 : i32
    %c0_i32_1 = arith.constant 0 : i32
    return %arg0, %c0_i32, %c0_i32_0 : i32, i32, i32
  }
  func.func @transform_1(%arg0: i32) -> (i32, i32, i32) {
    %c0_i32 = arith.constant 0 : i32
    %c0_i32_0 = arith.constant 0 : i32
    %c0_i32_1 = arith.constant 0 : i32
    return %arg0, %c0_i32, %c0_i32_0 : i32, i32, i32
  }
  func.func @transform_2(%arg0: i32) -> (i32, i32) {
    %c0_i32 = arith.constant 0 : i32
    %c0_i32_0 = arith.constant 0 : i32
    %c0_i32_1 = arith.constant 0 : i32
    return %c0_i32, %c0_i32_0 : i32, i32
  }
  func.func @transform_3(%arg0: i32) -> (i32, i32) {
    %c0_i32 = arith.constant 0 : i32
    %c0_i32_0 = arith.constant 0 : i32
    %c0_i32_1 = arith.constant 0 : i32
    return %c0_i32, %c0_i32_0 : i32, i32
  }
  func.func @transform_4(%arg0: i32) -> (i32, i32, i32) {
    %c0_i32 = arith.constant 0 : i32
    %c0_i32_0 = arith.constant 0 : i32
    %c0_i32_1 = arith.constant 0 : i32
    return %arg0, %c0_i32, %c0_i32_0 : i32, i32, i32
  }
}

</mosaic_0001>

<llo_original>
// kernel: tpu_custom_call.1
$region0: #{tpu_custom_call.1}
  #allocation0 [shape = 'u32[]', space=smem, size = 0x4, offset = 0x4, fixed_abs, tag = 'smem constant byte address 0x4 - core index']
  #allocation1 [shape = 'u32[144,128]{1,0:T(1,128)}', space=vmem, size = 0x12000, scoped, tag = 'internal scratch']
  %s0 = inlined_call_operand.hbm [shape: f32[2,2,128], index: 0, kind: input, shape index: {}]
  %s1 = inlined_call_operand.hbm [shape: f32[2,2,128], index: 1, kind: input, shape index: {}]
  %s2 = inlined_call_operand.vmem [shape: f32[1,32], index: 2, kind: input, shape index: {}]
  %s3 = inlined_call_operand.vmem [shape: f32[1,32], index: 3, kind: input, shape index: {}]
  %s4 = inlined_call_operand.hbm [shape: f32[2,2,128], index: 4, kind: output, shape index: {}]
  %s5 = sld [smem:[#allocation0]]
  $region34: #{tpu_custom_call.1} parent=0
    _
  %s7 = ssub.s32 1, %s5
  %s8 = scalar_select 0, %s7, %s5
  $region1: #{tpu_custom_call.1} parent=0
    #allocation2 [shape = 'u8[2048]{0}', space=vmem, size = 0x800, scoped, tag = 'input window, operand 0, single buffered']
    #allocation3 [shape = 's32[1]{0}', space=sflag, size = 0x4, scoped, tag = 'scoped memory for tpu_custom_call.1']
    #allocation4 [shape = 's32[1]{0}', space=sflag, size = 0x4, scoped, tag = 'scoped memory for tpu_custom_call.1']
    #allocation5 [shape = 'u8[2048]{0}', space=vmem, size = 0x800, scoped, tag = 'input window, operand 1, single buffered']
    #allocation6 [shape = 's32[1]{0}', space=sflag, size = 0x4, scoped, tag = 'scoped memory for tpu_custom_call.1']
    #allocation7 [shape = 'u8[2048]{0}', space=vmem, size = 0x800, scoped, tag = 'output window, operand 0, single buffered']
    %9 = vsyncpa [#allocation3], 0
    %10 = vsyncpa [#allocation6], 0
    %11 = vsyncpa [#allocation4], 0
    // Predicated region
    $region2: #{tpu_custom_call.1} parent=1 // pred_check
      _
    $region3: #{tpu_custom_call.1} parent=1 // pred_check_branch
      %13 = sbr.rel (0) target = $region5
    $region4: #{tpu_custom_call.1} parent=1 // pred_region
      %s15 = ssub.s32 64, 64
      %16 = vsyncadd [#allocation3], %s15
      %s17 = sshll.u32 [#allocation2], 4
      %s18 = int_to_ptr.vmem [resolvable:$true] %s17
      %23 = dma.hbm_to_vmem [thread:$0]  %s0, 64, %s18, [#allocation3], 32, 32, 2
    $region5: #{tpu_custom_call.1} parent=1 // pred_fallthru
      _
    // Predicated region
    $region6: #{tpu_custom_call.1} parent=1 // pred_check
      _
    $region7: #{tpu_custom_call.1} parent=1 // pred_check_branch
      %25 = sbr.rel (0) target = $region9
    $region8: #{tpu_custom_call.1} parent=1 // pred_region
      %s27 = ssub.s32 64, 64
      %28 = vsyncadd [#allocation6], %s27
      %s29 = sshll.u32 [#allocation5], 4
      %s30 = int_to_ptr.vmem [resolvable:$true] %s29
      %35 = dma.hbm_to_vmem [thread:$0]  %s1, 64, %s30, [#allocation6], 32, 32, 2
    $region9: #{tpu_custom_call.1} parent=1 // pred_fallthru
      _
    // Predicated region
    $region10: #{tpu_custom_call.1} parent=1 // pred_check
      _
    $region11: #{tpu_custom_call.1} parent=1 // pred_check_branch
      %37 = sbr.rel (0) target = $region13
    $region12: #{tpu_custom_call.1} parent=1 // pred_region
      _
    $region13: #{tpu_custom_call.1} parent=1 // pred_fallthru
      _
    // Predicated region
    $region14: #{tpu_custom_call.1} parent=1 // pred_check
      _
    $region15: #{tpu_custom_call.1} parent=1 // pred_check_branch
      %39 = sbr.rel (0) target = $region17
    $region16: #{tpu_custom_call.1} parent=1 // pred_region
      _
    $region17: #{tpu_custom_call.1} parent=1 // pred_fallthru
      _
    // Predicated region
    $region18: #{tpu_custom_call.1} parent=1 // pred_check
      _
    $region19: #{tpu_custom_call.1} parent=1 // pred_check_branch
      %41 = sbr.rel (0) target = $region21
    $region20: #{tpu_custom_call.1} parent=1 // pred_region
      %42 = dma.done [#allocation3], 64
    $region21: #{tpu_custom_call.1} parent=1 // pred_fallthru
      _
    // Predicated region
    $region22: #{tpu_custom_call.1} parent=1 // pred_check
      _
    $region23: #{tpu_custom_call.1} parent=1 // pred_check_branch
      %44 = sbr.rel (0) target = $region25
    $region24: #{tpu_custom_call.1} parent=1 // pred_region
      %45 = dma.done [#allocation6], 64
    $region25: #{tpu_custom_call.1} parent=1 // pred_fallthru
      _
    %v46 = vld [vmem:[#allocation2] sm:$0x3]
    %v47 = vld [vmem:[#allocation2 + $0x2] sm:$0x3]
    %v48 = vld [vmem:[#allocation5] sm:$0x3]
    %v49 = vld [vmem:[#allocation5 + $0x2] sm:$0x3]
    %v50 = vadd.f32 %v46, %v48
    %v51 = vadd.f32 %v47, %v49
    %vm52 = vcmask 1041408
    %v53 = vsel %vm52, %v50, 0.0
    %v54 = vrot.slane %v53, 4
    %v55 = vadd.f32 %v53, %v54
    %v56 = vrot.slane %v55, 2
    %v57 = vadd.f32 %v55, %v56
    %v58 = vrot.slane %v57, 1
    %v59 = vadd.f32 %v57, %v58
    %v60 = vsel %vm52, %v51, 0.0
    %v61 = vrot.slane %v60, 4
    %v62 = vadd.f32 %v60, %v61
    %v63 = vrot.slane %v62, 2
    %v64 = vadd.f32 %v62, %v63
    %v65 = vrot.slane %v64, 1
    %v66 = vadd.f32 %v64, %v65
    %v67 = vadd.f32 %v59, 0.0
    %v68 = vadd.f32 %v66, 0.0
    %v69 = vmul.f32 %v50, %v50
    %v70 = vmul.f32 %v51, %v51
    %v71 = vsel %vm52, %v69, 0.0
    %v72 = vrot.slane %v71, 4
    %v73 = vadd.f32 %v71, %v72
    %v74 = vrot.slane %v73, 2
    %v75 = vadd.f32 %v73, %v74
    %v76 = vrot.slane %v75, 1
    %v77 = vadd.f32 %v75, %v76
    %v78 = vsel %vm52, %v70, 0.0
    %v79 = vrot.slane %v78, 4
    %v80 = vadd.f32 %v78, %v79
    %v81 = vrot.slane %v80, 2
    %v82 = vadd.f32 %v80, %v81
    %v83 = vrot.slane %v82, 1
    %v84 = vadd.f32 %v82, %v83
    %v85 = vadd.f32 %v77, 0.0
    %v86 = vadd.f32 %v84, 0.0
    %89 = vrot.lane.b32.xlu0 %v67, 96
    %v90 = vpop.permute.xlu0 %89
    %91 = vrot.lane.b32.xlu0 %v68, 96
    %v92 = vpop.permute.xlu0 %91
    %v95 = vadd.f32 %v67, %v90
    %v96 = vadd.f32 %v68, %v92
    %97 = vrot.lane.b32.xlu0 %v67, 64
    %v98 = vpop.permute.xlu0 %97
    %99 = vrot.lane.b32.xlu0 %v68, 64
    %v100 = vpop.permute.xlu0 %99
    %v103 = vadd.f32 %v95, %v98
    %v104 = vadd.f32 %v96, %v100
    %105 = vrot.lane.b32.xlu0 %v67, 32
    %v106 = vpop.permute.xlu0 %105
    %107 = vrot.lane.b32.xlu0 %v68, 32
    %v108 = vpop.permute.xlu0 %107
    %v111 = vadd.f32 %v103, %v106
    %v112 = vadd.f32 %v104, %v108
    %115 = vrot.lane.b32.xlu0 %v85, 96
    %v116 = vpop.permute.xlu0 %115
    %117 = vrot.lane.b32.xlu0 %v86, 96
    %v118 = vpop.permute.xlu0 %117
    %v121 = vadd.f32 %v85, %v116
    %v122 = vadd.f32 %v86, %v118
    %123 = vrot.lane.b32.xlu0 %v85, 64
    %v124 = vpop.permute.xlu0 %123
    %125 = vrot.lane.b32.xlu0 %v86, 64
    %v126 = vpop.permute.xlu0 %125
    %v129 = vadd.f32 %v121, %v124
    %v130 = vadd.f32 %v122, %v126
    %131 = vrot.lane.b32.xlu0 %v85, 32
    %v132 = vpop.permute.xlu0 %131
    %133 = vrot.lane.b32.xlu0 %v86, 32
    %v134 = vpop.permute.xlu0 %133
    %v137 = vadd.f32 %v129, %v132
    %v138 = vadd.f32 %v130, %v134
    %v139 = vmul.f32 %v111, 0.125
    %v140 = vmul.f32 %v112, 0.125
    %v141 = vmul.f32 %v137, 0.125
    %v142 = vmul.f32 %v138, 0.125
    %v143 = vmul.f32 %v139, %v139
    %v144 = vmul.f32 %v140, %v140
    %v145 = vsub.f32 %v141, %v143
    %v146 = vsub.f32 %v142, %v144
    %v147 = vadd.f32 %v145, 1e-05
    %v148 = vadd.f32 %v146, 1e-05
    %v149 = vrsqrt.pop %v147
    %v150 = vrsqrt.pop %v148
    %v151 = vld [vmem:[%s2] sm:$0x1]
    %v153 = vlaneseq
    %v154 = vshrl.u32 %v153, 7
    %v155 = vsub.s32 0, %v154
    %v156 = vrot.slane %v151, %v155
    %v158 = vmul.f32 %v149, %v156
    %v159 = vmul.f32 %v150, %v156
    %v160 = vld [vmem:[%s3] sm:$0x1]
    %v161 = vmul.f32 %v139, %v158
    %v162 = vmul.f32 %v140, %v159
    %v164 = vlaneseq
    %v165 = vshrl.u32 %v164, 7
    %v166 = vsub.s32 0, %v165
    %v167 = vrot.slane %v160, %v166
    %v171 = vrot.slane %v162, 7
    %vm172 = vcmask 1041409
    %v173 = vsel %vm172, %v171, %v161
    %v175 = vsub.f32 %v167, %v173
    %v178 = vrot.slane %v159, 7
    %v179 = vsel %vm172, %v178, %v158
    %181 = vrot.lane.b32.xlu0 %v179, 32
    %v182 = vpop.permute.xlu0 %181
    %184 = vrot.lane.b32.xlu0 %v179, 64
    %v185 = vpop.permute.xlu0 %184
    %187 = vrot.lane.b32.xlu0 %v179, 96
    %v188 = vpop.permute.xlu0 %187
    %vm190 = vcmask 261120
    %v191 = vsel %vm190, %v179, %v182
    %vm192 = vcmask 523264
    %v193 = vsel %vm192, %v191, %v185
    %vm194 = vcmask 785408
    %v195 = vsel %vm194, %v193, %v188
    %197 = vrot.lane.b32.xlu0 %v175, 32
    %v198 = vpop.permute.xlu0 %197
    %200 = vrot.lane.b32.xlu0 %v175, 64
    %v201 = vpop.permute.xlu0 %200
    %203 = vrot.lane.b32.xlu0 %v175, 96
    %v204 = vpop.permute.xlu0 %203
    %v206 = vsel %vm190, %v175, %v198
    %v207 = vsel %vm192, %v206, %v201
    %v208 = vsel %vm194, %v207, %v204
    %v211 = vunpack.c.l.s4 1966171168
    %v212 = vunpack.c.0.s8 %v211
    %v213 = vlaneseq
    %v214 = vshrl.u32 %v213, 7
    %v215 = vsub.s32 %v212, %v214
    %v216 = vrot.slane %v195, %v215
    %v217 = vcombine.high %v216, %v216
    %v219 = vunpack.c.l.s4 1966171168
    %v220 = vunpack.c.0.s8 %v219
    %v221 = vlaneseq
    %v222 = vshrl.u32 %v221, 7
    %v223 = vsub.s32 %v220, %v222
    %v224 = vrot.slane %v216, %v223
    %v226 = vunpack.c.l.s4 1966171168
    %v227 = vunpack.c.0.s8 %v226
    %v228 = vlaneseq
    %v229 = vshrl.u32 %v228, 7
    %v230 = vsub.s32 %v227, %v229
    %v231 = vrot.slane %v217, %v230
    %v234 = vunpack.c.l.s4 1966171168
    %v235 = vunpack.c.0.s8 %v234
    %v236 = vlaneseq
    %v237 = vshrl.u32 %v236, 7
    %v238 = vsub.s32 %v235, %v237
    %v239 = vrot.slane %v208, %v238
    %v240 = vcombine.high %v239, %v239
    %v242 = vunpack.c.l.s4 1966171168
    %v243 = vunpack.c.0.s8 %v242
    %v244 = vlaneseq
    %v245 = vshrl.u32 %v244, 7
    %v246 = vsub.s32 %v243, %v245
    %v247 = vrot.slane %v239, %v246
    %v249 = vunpack.c.l.s4 1966171168
    %v250 = vunpack.c.0.s8 %v249
    %v251 = vlaneseq
    %v252 = vshrl.u32 %v251, 7
    %v253 = vsub.s32 %v250, %v252
    %v254 = vrot.slane %v240, %v253
    %v255 = vlaneseq
    %v256 = vshrl.u32 %v255, 7
    %v257 = vsub.s32 0, %v256
    %v258 = vrot.slane %v224, %v257
    %v259 = vlaneseq
    %v260 = vshrl.u32 %v259, 7
    %v261 = vsub.s32 0, %v260
    %v262 = vrot.slane %v231, %v261
    %v265 = vmul.f32 %v50, %v258
    %v266 = vmul.f32 %v51, %v262
    %v267 = vlaneseq
    %v268 = vshrl.u32 %v267, 7
    %v269 = vsub.s32 0, %v268
    %v270 = vrot.slane %v247, %v269
    %v271 = vlaneseq
    %v272 = vshrl.u32 %v271, 7
    %v273 = vsub.s32 0, %v272
    %v274 = vrot.slane %v254, %v273
    %v277 = vadd.f32 %v265, %v270
    %v278 = vadd.f32 %v266, %v274
    %279 = vst [vmem:[#allocation7] sm:$0x3] %v277
    %280 = vst [vmem:[#allocation7 + $0x2] sm:$0x3] %v278
    // Predicated region
    $region26: #{tpu_custom_call.1} parent=1 // pred_check
      _
    $region27: #{tpu_custom_call.1} parent=1 // pred_check_branch
      %282 = sbr.rel (0) target = $region29
    $region28: #{tpu_custom_call.1} parent=1 // pred_region
      %s284 = ssub.s32 64, 64
      %285 = vsyncadd [#allocation4], %s284
      %s286 = sshll.u32 [#allocation7], 4
      %s287 = int_to_ptr.vmem [resolvable:$true] %s286
      %292 = dma.vmem_to_hbm [thread:$0]  %s287, 64, %s4, [#allocation4], 32, 32, 2
    $region29: #{tpu_custom_call.1} parent=1 // pred_fallthru
      _
    // Predicated region
    $region30: #{tpu_custom_call.1} parent=1 // pred_check
      _
    $region31: #{tpu_custom_call.1} parent=1 // pred_check_branch
      %294 = sbr.rel (0) target = $region33
    $region32: #{tpu_custom_call.1} parent=1 // pred_region
      %295 = dma.done [#allocation4], 64
    $region33: #{tpu_custom_call.1} parent=1 // pred_fallthru
      _
    %296 = vsyncpa [#allocation3], 1
    %297 = vsyncpa [#allocation6], 1
    %298 = vsyncpa [#allocation4], 1

</llo_original>
